<compile_context>
chip_gen: v7x
topology: tpu7x:2x2x1
jax: 0.10.0
libtpu: 0.0.40
codegen_flags: <defaults>
</compile_context>

<pallas_src>
import jax
import jax.numpy as jnp
from jax.experimental import pallas as pl
from jax.experimental.pallas import tpu as pltpu


def make_rnn_kernel(num_layers):
    """Builds the per-time-step kernel body for a `num_layers`-deep tanh RNN."""

    def kernel(*refs):
        # refs = [x_ref, (w_x, w_h, b) * num_layers, out_ref, hn_ref, h_scr]
        x_ref = refs[0]
        w_refs = refs[1:1 + 3 * num_layers]
        out_ref = refs[1 + 3 * num_layers]
        hn_ref = refs[2 + 3 * num_layers]
        h_scr = refs[3 + 3 * num_layers]

        t = pl.program_id(0)

        # Zero the carried hidden state on the first time step (initHidden()).
        @pl.when(t == 0)
        def _():
            h_scr[...] = jnp.zeros_like(h_scr)

        # One RNN step through the layer stack:
        #   h_l(t) = tanh(x_l(t) @ W_x_l + h_l(t-1) @ W_h_l + b_l)
        layer_in = x_ref[0]                       # [B, input_size]
        for l in range(num_layers):
            w_x = w_refs[3 * l]
            w_h = w_refs[3 * l + 1]
            b = w_refs[3 * l + 2]
            h_prev = h_scr[l]                     # [B, H]
            h_new = jnp.tanh(
                jnp.dot(layer_in, w_x[...], preferred_element_type=jnp.float32)
                + jnp.dot(h_prev, w_h[...], preferred_element_type=jnp.float32)
                + b[...]
            )
            h_scr[l] = h_new
            layer_in = h_new

        # On the final step, emit hn (all layers) and log_softmax(out[-1]).
        # For a unidirectional nn.RNN, out[-1] == hn[num_layers - 1].
        @pl.when(t == pl.num_programs(0) - 1)
        def _():
            hn_ref[...] = h_scr[...]
            logits = h_scr[num_layers - 1]        # [B, H]
            m = jnp.max(logits, axis=1, keepdims=True)
            shifted = logits - m
            lse = jnp.log(jnp.sum(jnp.exp(shifted), axis=1, keepdims=True))
            out_ref[...] = (shifted - lse).astype(out_ref.dtype)

    return kernel


def rnn_forward(x, params):
    """Runs the full-sequence RNN + final log_softmax in one pallas_call.

    x: [T, B, input_size]  (seq-major, like nn.RNN with batch_first=False)
    params: list of (w_x [in_l, H], w_h [H, H], b [1, H]) per layer, where
            b already equals b_ih + b_hh.
    Returns (log_softmax(out[-1], dim=1) [B, H], hn [num_layers, B, H]).
    """
    T, B, I = x.shape
    num_layers = len(params)
    H = params[0][1].shape[0]

    # Pad batch up to the f32 sublane count (8) so vregs/MXU rows are used.
    B_pad = max(8, ((B + 7) // 8) * 8)
    if B_pad != B:
        x = jnp.pad(x, ((0, 0), (0, B_pad - B), (0, 0)))

    flat_w = [w for layer in params for w in layer]

    # x[t] streamed per step; weights/biases resident (constant index_map).
    in_specs = [pl.BlockSpec((1, B_pad, I), lambda t: (t, 0, 0))]
    for w in flat_w:
        in_specs.append(pl.BlockSpec(w.shape, lambda t: (0, 0)))

    out_shapes = (
        jax.ShapeDtypeStruct((B_pad, H), jnp.float32),
        jax.ShapeDtypeStruct((num_layers, B_pad, H), jnp.float32),
    )
    out_specs = (
        pl.BlockSpec((B_pad, H), lambda t: (0, 0)),
        pl.BlockSpec((num_layers, B_pad, H), lambda t: (0, 0, 0)),
    )

    grid_spec = pltpu.PrefetchScalarGridSpec(
        num_scalar_prefetch=0,
        grid=(T,),
        in_specs=in_specs,
        out_specs=out_specs,
        scratch_shapes=[pltpu.VMEM((num_layers, B_pad, H), jnp.float32)],
    )

    out, hn = pl.pallas_call(
        make_rnn_kernel(num_layers),
        out_shape=out_shapes,
        grid_spec=grid_spec,
        compiler_params=pltpu.CompilerParams(
            dimension_semantics=("arbitrary",)),   # time carries state
    )(x, *flat_w)

    # Slice away the batch padding.
    return out[:B], hn[:, :B]


def init_params(key, input_size, hidden_size, num_layers):
    """PyTorch nn.RNN-style init: U(-1/sqrt(H), +1/sqrt(H)) for every tensor.
    Weights are stored pre-transposed [in, out]; biases pre-summed (b_ih+b_hh)."""
    bound = 1.0 / jnp.sqrt(hidden_size)
    params = []
    for l in range(num_layers):
        in_l = input_size if l == 0 else hidden_size
        key, k1, k2, k3, k4 = jax.random.split(key, 5)
        w_x = jax.random.uniform(k1, (in_l, hidden_size), jnp.float32, -bound, bound)
        w_h = jax.random.uniform(k2, (hidden_size, hidden_size), jnp.float32, -bound, bound)
        b_ih = jax.random.uniform(k3, (1, hidden_size), jnp.float32, -bound, bound)
        b_hh = jax.random.uniform(k4, (1, hidden_size), jnp.float32, -bound, bound)
        params.append((w_x, w_h, b_ih + b_hh))
    return params


def rnn_reference(x, params):
    """Plain-JAX reference with identical math (nn.RNN tanh + log_softmax)."""
    T, B, _ = x.shape
    num_layers = len(params)
    H = params[0][1].shape[0]
    h = [jnp.zeros((B, H), jnp.float32) for _ in range(num_layers)]
    last = None
    for t in range(T):
        inp = x[t]
        for l, (w_x, w_h, b) in enumerate(params):
            h[l] = jnp.tanh(inp @ w_x + h[l] @ w_h + b)
            inp = h[l]
        last = h[num_layers - 1]
    out = jax.nn.log_softmax(last, axis=1)
    hn = jnp.stack(h, axis=0)
    return out, hn


if __name__ == "__main__":
    # Small shapes consistent with the word-classification setup:
    # one-hot input of size 57, hidden 32, 2 layers, seq 8, batch 2.
    seq_len = 8
    batch = 2
    input_size = 57
    hidden_size = 32
    num_layers = 2

    key = jax.random.PRNGKey(0)
    kx, kp = jax.random.split(key)
    x = jax.random.normal(kx, (seq_len, batch, input_size), jnp.float32)
    params = init_params(kp, input_size, hidden_size, num_layers)

    out, hn = rnn_forward(x, params)
    jax.block_until_ready((out, hn))

    ref_out, ref_hn = rnn_reference(x, params)
    assert out.shape == (batch, hidden_size)
    assert hn.shape == (num_layers, batch, hidden_size)
    assert jnp.allclose(out, ref_out, atol=1e-4, rtol=1e-4), "log_softmax(out[-1]) mismatch"
    assert jnp.allclose(hn, ref_hn, atol=1e-4, rtol=1e-4), "hn mismatch"

    print("KERNEL_OK")
</pallas_src>

<mosaic_0001>
module attributes {stable_mosaic.version = 11 : i64} {
  func.func @kernel(%arg0: i32, %arg1: memref<1x8x57xf32, #tpu.memory_space<vmem>>, %arg2: memref<57x32xf32, #tpu.memory_space<vmem>>, %arg3: memref<32x32xf32, #tpu.memory_space<vmem>>, %arg4: memref<1x32xf32, #tpu.memory_space<vmem>>, %arg5: memref<32x32xf32, #tpu.memory_space<vmem>>, %arg6: memref<32x32xf32, #tpu.memory_space<vmem>>, %arg7: memref<1x32xf32, #tpu.memory_space<vmem>>, %arg8: memref<8x32xf32, #tpu.memory_space<vmem>>, %arg9: memref<2x8x32xf32, #tpu.memory_space<vmem>>, %arg10: memref<2x8x32xf32, #tpu.memory_space<vmem>>) attributes {dimension_semantics = [#tpu.dimension_semantics<arbitrary>], iteration_bounds = array<i64: 8>, scalar_prefetch = 0 : i64, scratch_operands = 1 : i64, tpu.core_type = #tpu.core_type<tc>, window_params = [{transform_indices = @transform_0, window_bounds = array<i64: 1, 8, 57>}, {pipeline_mode = #tpu.pipeline_mode<synchronous>, transform_indices = @transform_1, window_bounds = array<i64: 57, 32>}, {pipeline_mode = #tpu.pipeline_mode<synchronous>, transform_indices = @transform_2, window_bounds = array<i64: 32, 32>}, {pipeline_mode = #tpu.pipeline_mode<synchronous>, transform_indices = @transform_3, window_bounds = array<i64: 1, 32>}, {pipeline_mode = #tpu.pipeline_mode<synchronous>, transform_indices = @transform_4, window_bounds = array<i64: 32, 32>}, {pipeline_mode = #tpu.pipeline_mode<synchronous>, transform_indices = @transform_5, window_bounds = array<i64: 32, 32>}, {pipeline_mode = #tpu.pipeline_mode<synchronous>, transform_indices = @transform_6, window_bounds = array<i64: 1, 32>}, {pipeline_mode = #tpu.pipeline_mode<synchronous>, transform_indices = @transform_7, window_bounds = array<i64: 8, 32>}, {pipeline_mode = #tpu.pipeline_mode<synchronous>, transform_indices = @transform_8, window_bounds = array<i64: 2, 8, 32>}]} {
    %c0_i32 = arith.constant 0 : i32
    %0 = arith.cmpi eq, %arg0, %c0_i32 : i32
    %1 = arith.extui %0 : i1 to i32
    %c0_i32_0 = arith.constant 0 : i32
    %2 = arith.cmpi ne, %1, %c0_i32_0 : i32
    scf.if %2 {
      %cst_30 = arith.constant 0.000000e+00 : f32
      %36 = vector.broadcast %cst_30 : f32 to vector<2x8x32xf32>
      %c0_31 = arith.constant 0 : index
      %c0_32 = arith.constant 0 : index
      %c0_33 = arith.constant 0 : index
      %37 = vector.load %arg10[%c0_31, %c0_32, %c0_33] : memref<2x8x32xf32, #tpu.memory_space<vmem>>, vector<2x8x32xf32>
      tpu.vector_store %arg10[%c0_31, %c0_32, %c0_33], %36 {strides = array<i32>} : memref<2x8x32xf32, #tpu.memory_space<vmem>>, vector<2x8x32xf32>,
    } else {
    }
    %c0 = arith.constant 0 : index
    %c0_1 = arith.constant 0 : index
    %c0_2 = arith.constant 0 : index
    %3 = vector.load %arg1[%c0, %c0_1, %c0_2] : memref<1x8x57xf32, #tpu.memory_space<vmem>>, vector<1x8x57xf32>
    %4 = vector.shape_cast %3 : vector<1x8x57xf32> to vector<8x57xf32>
    %c0_3 = arith.constant 0 : index
    %c0_4 = arith.constant 0 : index
    %c0_5 = arith.constant 0 : index
    %5 = vector.load %arg10[%c0_3, %c0_4, %c0_5] : memref<2x8x32xf32, #tpu.memory_space<vmem>>, vector<1x8x32xf32>
    %6 = vector.shape_cast %5 : vector<1x8x32xf32> to vector<8x32xf32>
    %c0_6 = arith.constant 0 : index
    %c0_7 = arith.constant 0 : index
    %7 = vector.load %arg2[%c0_6, %c0_7] : memref<57x32xf32, #tpu.memory_space<vmem>>, vector<57x32xf32>
    %cst = arith.constant dense<0.000000e+00> : vector<8x32xf32>
    %8 = tpu.matmul %4, %7, %cst {dimension_numbers = #tpu.dot_dimension_numbers<[1], [0], [0], [1], [0, 0, 1, 1], [], []>} : vector<8x57xf32>, vector<57x32xf32>, vector<8x32xf32> -> vector<8x32xf32>
    %c0_8 = arith.constant 0 : index
    %c0_9 = arith.constant 0 : index
    %9 = vector.load %arg3[%c0_8, %c0_9] : memref<32x32xf32, #tpu.memory_space<vmem>>, vector<32x32xf32>
    %cst_10 = arith.constant dense<0.000000e+00> : vector<8x32xf32>
    %10 = tpu.matmul %6, %9, %cst_10 {dimension_numbers = #tpu.dot_dimension_numbers<[1], [0], [0], [1], [0, 0, 1, 1], [], []>} : vector<8x32xf32>, vector<32x32xf32>, vector<8x32xf32> -> vector<8x32xf32>
    %11 = arith.addf %8, %10 : vector<8x32xf32>
    %c0_11 = arith.constant 0 : index
    %c0_12 = arith.constant 0 : index
    %12 = vector.load %arg4[%c0_11, %c0_12] : memref<1x32xf32, #tpu.memory_space<vmem>>, vector<1x32xf32>
    %13 = vector.broadcast %12 : vector<1x32xf32> to vector<8x32xf32>
    %14 = arith.addf %11, %13 : vector<8x32xf32>
    %15 = math.tanh %14 : vector<8x32xf32>
    %c0_13 = arith.constant 0 : index
    %c0_14 = arith.constant 0 : index
    %c0_15 = arith.constant 0 : index
    %16 = vector.load %arg10[%c0_13, %c0_14, %c0_15] : memref<2x8x32xf32, #tpu.memory_space<vmem>>, vector<1x8x32xf32>
    %17 = vector.shape_cast %16 : vector<1x8x32xf32> to vector<8x32xf32>
    %18 = vector.shape_cast %15 : vector<8x32xf32> to vector<1x8x32xf32>
    tpu.vector_store %arg10[%c0_13, %c0_14, %c0_15], %18 {strides = array<i32>} : memref<2x8x32xf32, #tpu.memory_space<vmem>>, vector<1x8x32xf32>,
    %c1 = arith.constant 1 : index
    %c0_16 = arith.constant 0 : index
    %c0_17 = arith.constant 0 : index
    %19 = vector.load %arg10[%c1, %c0_16, %c0_17] : memref<2x8x32xf32, #tpu.memory_space<vmem>>, vector<1x8x32xf32>
    %20 = vector.shape_cast %19 : vector<1x8x32xf32> to vector<8x32xf32>
    %c0_18 = arith.constant 0 : index
    %c0_19 = arith.constant 0 : index
    %21 = vector.load %arg5[%c0_18, %c0_19] : memref<32x32xf32, #tpu.memory_space<vmem>>, vector<32x32xf32>
    %cst_20 = arith.constant dense<0.000000e+00> : vector<8x32xf32>
    %22 = tpu.matmul %15, %21, %cst_20 {dimension_numbers = #tpu.dot_dimension_numbers<[1], [0], [0], [1], [0, 0, 1, 1], [], []>} : vector<8x32xf32>, vector<32x32xf32>, vector<8x32xf32> -> vector<8x32xf32>
    %c0_21 = arith.constant 0 : index
    %c0_22 = arith.constant 0 : index
    %23 = vector.load %arg6[%c0_21, %c0_22] : memref<32x32xf32, #tpu.memory_space<vmem>>, vector<32x32xf32>
    %cst_23 = arith.constant dense<0.000000e+00> : vector<8x32xf32>
    %24 = tpu.matmul %20, %23, %cst_23 {dimension_numbers = #tpu.dot_dimension_numbers<[1], [0], [0], [1], [0, 0, 1, 1], [], []>} : vector<8x32xf32>, vector<32x32xf32>, vector<8x32xf32> -> vector<8x32xf32>
    %25 = arith.addf %22, %24 : vector<8x32xf32>
    %c0_24 = arith.constant 0 : index
    %c0_25 = arith.constant 0 : index
    %26 = vector.load %arg7[%c0_24, %c0_25] : memref<1x32xf32, #tpu.memory_space<vmem>>, vector<1x32xf32>
    %27 = vector.broadcast %26 : vector<1x32xf32> to vector<8x32xf32>
    %28 = arith.addf %25, %27 : vector<8x32xf32>
    %29 = math.tanh %28 : vector<8x32xf32>
    %c1_26 = arith.constant 1 : index
    %c0_27 = arith.constant 0 : index
    %c0_28 = arith.constant 0 : index
    %30 = vector.load %arg10[%c1_26, %c0_27, %c0_28] : memref<2x8x32xf32, #tpu.memory_space<vmem>>, vector<1x8x32xf32>
    %31 = vector.shape_cast %30 : vector<1x8x32xf32> to vector<8x32xf32>
    %32 = vector.shape_cast %29 : vector<8x32xf32> to vector<1x8x32xf32>
    tpu.vector_store %arg10[%c1_26, %c0_27, %c0_28], %32 {strides = array<i32>} : memref<2x8x32xf32, #tpu.memory_space<vmem>>, vector<1x8x32xf32>,
    %c7_i32 = arith.constant 7 : i32
    %33 = arith.cmpi eq, %arg0, %c7_i32 : i32
    %34 = arith.extui %33 : i1 to i32
    %c0_i32_29 = arith.constant 0 : i32
    %35 = arith.cmpi ne, %34, %c0_i32_29 : i32
    scf.if %35 {
      %c0_30 = arith.constant 0 : index
      %c0_31 = arith.constant 0 : index
      %c0_32 = arith.constant 0 : index
      %36 = vector.load %arg10[%c0_30, %c0_31, %c0_32] : memref<2x8x32xf32, #tpu.memory_space<vmem>>, vector<2x8x32xf32>
      %c0_33 = arith.constant 0 : index
      %c0_34 = arith.constant 0 : index
      %c0_35 = arith.constant 0 : index
      %37 = vector.load %arg9[%c0_33, %c0_34, %c0_35] : memref<2x8x32xf32, #tpu.memory_space<vmem>>, vector<2x8x32xf32>
      tpu.vector_store %arg9[%c0_33, %c0_34, %c0_35], %36 {strides = array<i32>} : memref<2x8x32xf32, #tpu.memory_space<vmem>>, vector<2x8x32xf32>,
      %c1_36 = arith.constant 1 : index
      %c0_37 = arith.constant 0 : index
      %c0_38 = arith.constant 0 : index
      %38 = vector.load %arg10[%c1_36, %c0_37, %c0_38] : memref<2x8x32xf32, #tpu.memory_space<vmem>>, vector<1x8x32xf32>
      %39 = vector.shape_cast %38 : vector<1x8x32xf32> to vector<8x32xf32>
      %cst_39 = arith.constant dense<0xFF800000> : vector<8xf32>
      %40 = vector.multi_reduction <maximumf>, %39, %cst_39 [1] : vector<8x32xf32> to vector<8xf32>
      %41 = vector.shape_cast %40 : vector<8xf32> to vector<8x1xf32>
      %42 = vector.broadcast %41 : vector<8x1xf32> to vector<8x32xf32>
      %43 = arith.subf %39, %42 : vector<8x32xf32>
      %44 = math.exp %43 : vector<8x32xf32>
      %cst_40 = arith.constant dense<0.000000e+00> : vector<8xf32>
      %45 = vector.multi_reduction <add>, %44, %cst_40 [1] : vector<8x32xf32> to vector<8xf32>
      %46 = vector.shape_cast %45 : vector<8xf32> to vector<8x1xf32>
      %47 = math.log %46 : vector<8x1xf32>
      %48 = vector.broadcast %47 : vector<8x1xf32> to vector<8x32xf32>
      %49 = arith.subf %43, %48 : vector<8x32xf32>
      %c0_41 = arith.constant 0 : index
      %c0_42 = arith.constant 0 : index
      %50 = vector.load %arg8[%c0_41, %c0_42] : memref<8x32xf32, #tpu.memory_space<vmem>>, vector<8x32xf32>
      tpu.vector_store %arg8[%c0_41, %c0_42], %49 {strides = array<i32>} : memref<8x32xf32, #tpu.memory_space<vmem>>, vector<8x32xf32>,
    } else {
    }
    return
  }
  func.func @transform_0(%arg0: i32) -> (i32, i32, i32) {
    %c0_i32 = arith.constant 0 : i32
    %c0_i32_0 = arith.constant 0 : i32
    %c0_i32_1 = arith.constant 0 : i32
    return %arg0, %c0_i32, %c0_i32_0 : i32, i32, i32
  }
  func.func @transform_1(%arg0: i32) -> (i32, i32) {
    %c0_i32 = arith.constant 0 : i32
    %c0_i32_0 = arith.constant 0 : i32
    %c0_i32_1 = arith.constant 0 : i32
    return %c0_i32, %c0_i32_0 : i32, i32
  }
  func.func @transform_2(%arg0: i32) -> (i32, i32) {
    %c0_i32 = arith.constant 0 : i32
    %c0_i32_0 = arith.constant 0 : i32
    %c0_i32_1 = arith.constant 0 : i32
    return %c0_i32, %c0_i32_0 : i32, i32
  }
  func.func @transform_3(%arg0: i32) -> (i32, i32) {
    %c0_i32 = arith.constant 0 : i32
    %c0_i32_0 = arith.constant 0 : i32
    %c0_i32_1 = arith.constant 0 : i32
    return %c0_i32, %c0_i32_0 : i32, i32
  }
  func.func @transform_4(%arg0: i32) -> (i32, i32) {
    %c0_i32 = arith.constant 0 : i32
    %c0_i32_0 = arith.constant 0 : i32
    %c0_i32_1 = arith.constant 0 : i32
    return %c0_i32, %c0_i32_0 : i32, i32
  }
  func.func @transform_5(%arg0: i32) -> (i32, i32) {
    %c0_i32 = arith.constant 0 : i32
    %c0_i32_0 = arith.constant 0 : i32
    %c0_i32_1 = arith.constant 0 : i32
    return %c0_i32, %c0_i32_0 : i32, i32
  }
  func.func @transform_6(%arg0: i32) -> (i32, i32) {
    %c0_i32 = arith.constant 0 : i32
    %c0_i32_0 = arith.constant 0 : i32
    %c0_i32_1 = arith.constant 0 : i32
    return %c0_i32, %c0_i32_0 : i32, i32
  }
  func.func @transform_7(%arg0: i32) -> (i32, i32) {
    %c0_i32 = arith.constant 0 : i32
    %c0_i32_0 = arith.constant 0 : i32
    %c0_i32_1 = arith.constant 0 : i32
    return %c0_i32, %c0_i32_0 : i32, i32
  }
  func.func @transform_8(%arg0: i32) -> (i32, i32, i32) {
    %c0_i32 = arith.constant 0 : i32
    %c0_i32_0 = arith.constant 0 : i32
    %c0_i32_1 = arith.constant 0 : i32
    %c0_i32_2 = arith.constant 0 : i32
    return %c0_i32, %c0_i32_0, %c0_i32_1 : i32, i32, i32
  }
}

</mosaic_0001>

<llo_original>
// kernel: tpu_custom_call.1
$region0: #{tpu_custom_call.1}
  #allocation0 [shape = 'u32[]', space=smem, size = 0x4, offset = 0x4, fixed_abs, tag = 'smem constant byte address 0x4 - core index']
  #allocation1 [shape = 'u32[144,128]{1,0:T(1,128)}', space=vmem, size = 0x12000, scoped, tag = 'internal scratch']
  #allocation2 [shape = 'f32[2,8,32]{2,1,0:T(8,128)}', space=vmem, size = 0x2000, scoped, tag = 'scratch operand']
  %s0 = inlined_call_operand.vmem [shape: f32[8,8,57], index: 0, kind: input, shape index: {}]
  %s1 = inlined_call_operand.vmem [shape: f32[57,32], index: 1, kind: input, shape index: {}]
  %s2 = inlined_call_operand.vmem [shape: f32[32,32], index: 2, kind: input, shape index: {}]
  %s3 = inlined_call_operand.vmem [shape: f32[1,32], index: 3, kind: input, shape index: {}]
  %s4 = inlined_call_operand.hbm [shape: f32[32,32], index: 4, kind: input, shape index: {}]
  %s5 = inlined_call_operand.hbm [shape: f32[32,32], index: 5, kind: input, shape index: {}]
  %s6 = inlined_call_operand.vmem [shape: f32[1,32], index: 6, kind: input, shape index: {}]
  %s7 = inlined_call_operand.hbm [shape: f32[8,32], index: 7, kind: output, shape index: {0}]
  %s8 = inlined_call_operand.hbm [shape: f32[2,8,32], index: 8, kind: output, shape index: {1}]
  %9 = xla_tuple %s7, %s8
  %s10 = sld [smem:[#allocation0]]
  $region85: #{tpu_custom_call.1} parent=0
    _
  %s12 = ssub.s32 1, %s10
  %s13 = scalar_select 0, %s12, %s10
  $region1: #{tpu_custom_call.1} parent=0
    #allocation3 [shape = 'u8[16384]{0}', space=vmem, size = 0x4000, scoped, tag = 'input window, operand 4, single buffered']
    #allocation4 [shape = 's32[2]{0}', space=sflag, size = 0x8, scoped, tag = 'scoped memory for tpu_custom_call.1']
    #allocation5 [shape = 's32[2]{0}', space=sflag, size = 0x8, scoped, tag = 'scoped memory for tpu_custom_call.1']
    #allocation6 [shape = 'u8[16384]{0}', space=vmem, size = 0x4000, scoped, tag = 'input window, operand 5, single buffered']
    #allocation7 [shape = 's32[1]{0}', space=sflag, size = 0x4, scoped, tag = 'scoped memory for tpu_custom_call.1']
    #allocation8 [shape = 'u8[4096]{0}', space=vmem, size = 0x1000, scoped, tag = 'output window, operand 0, single buffered']
    #allocation9 [shape = 'u8[8192]{0}', space=vmem, size = 0x2000, scoped, tag = 'output window, operand 1, single buffered']
    #allocation10 [shape = 's32[1]{0}', space=sflag, size = 0x4, scoped, tag = 'scoped memory for tpu_custom_call.1']
    %14 = vsyncpa [#allocation4], 0
    %15 = vsyncpa [#allocation7], 0
    %16 = vsyncpa [#allocation5], 0
    %17 = vsyncpa [#allocation10], 0
    loop: start=0, step=1, limit=10
    $region2: #{tpu_custom_call.1} parent=1 // loop_pre_header
      _
    $region3: #{tpu_custom_call.1} parent=1 // loop_header
      %s19 = sphi 0, %s23
      %p20 = scmp.ge.s32.totalorder %s19, 10
      %s29 = sphi 0, %s31
      %s32 = sphi 0, %s29
      %s33 = sphi 0, %s32
      %s49 = sphi 0, %s33
      %s53 = sphi 0, %s53
      %s55 = sphi 0, %s53
      %s56 = sphi 0, %s55
      %s70 = sphi 0, %s56
      %s74 = sphi 0, %s74
      %s76 = sphi 0, %s74
      %s77 = sphi 0, %s76
      %s91 = sphi 0, %s77
      %s95 = sphi 0, %s95
      %s97 = sphi 0, %s95
      %s98 = sphi 0, %s97
      %s112 = sphi 0, %s98
      %s116 = sphi 0, %s116
      %s118 = sphi 0, %s116
      %s119 = sphi 0, %s118
      %s133 = sphi 0, %s119
      %s137 = sphi 0, %s137
      %s139 = sphi 0, %s137
      %s140 = sphi 0, %s139
      %s154 = sphi 0, %s140
      %s158 = sphi 0, %s158
      %s160 = sphi 0, %s158
      %s161 = sphi 0, %s160
      %s175 = sphi 0, %s161
      %s179 = sphi 0, %s179
      %s181 = sphi 0, %s179
      %s182 = sphi 0, %s181
      %s196 = sphi 0, %s182
      %s200 = sphi 0, %s200
      %s202 = sphi 0, %s200
      %s203 = sphi 0, %s202
      %s217 = sphi 0, %s203
    $region4: #{tpu_custom_call.1} parent=1 // loop_header_branch
      %22 = sbr.rel (%p20) target = $region8
    $region5: #{tpu_custom_call.1} parent=1 // loop_body
      %s24 = ssub.s32 %s19, 1
      %s25 = ssub.s32 %s19, 2
      %s26 = sadd.s32 %s19, 1
      %s27 = ssub.s32 %s19, %s26
      %p28 = scmp.eq.s32.totalorder %s27, 0
      %s30 = sadd.s32 %s29, 1
      %s31 = scalar_select %p28, %s29, %s30
      %p34 = pneg %p28
      %p35 = scmp.eq.s32.totalorder %s19, 7
      %p36 = por %p34, %p35
      %p37 = scmp.ne.s32.totalorder %s29, %s32
      %p38 = scmp.eq.s32.totalorder %s19, 0
      %p39 = por %p37, %p38
      %p40 = scmp.ne.s32.totalorder %s29, %s32
      %p41 = scmp.eq.s32.totalorder %s24, 7
      %p42 = por %p40, %p41
      %p43 = scmp.ne.s32.totalorder %s32, %s33
      %p44 = scmp.eq.s32.totalorder %s24, 0
      %p45 = por %p43, %p44
      %p46 = scmp.ne.s32.totalorder %s32, %s33
      %p47 = scmp.eq.s32.totalorder %s25, 7
      %p48 = por %p46, %p47
      %p50 = scmp.ne.s32.totalorder %s33, %s49
      %p51 = scmp.eq.s32.totalorder %s25, 0
      %p52 = por %p50, %p51
      %s54 = sadd.s32 %s53, 1
      %p57 = scmp.eq.s32.totalorder %s19, 7
      %p58 = scmp.ne.s32.totalorder %s53, %s55
      %p59 = scmp.eq.s32.totalorder %s19, 0
      %p60 = por %p58, %p59
      %p61 = scmp.ne.s32.totalorder %s53, %s55
      %p62 = scmp.eq.s32.totalorder %s24, 7
      %p63 = por %p61, %p62
      %p64 = scmp.ne.s32.totalorder %s55, %s56
      %p65 = scmp.eq.s32.totalorder %s24, 0
      %p66 = por %p64, %p65
      %p67 = scmp.ne.s32.totalorder %s55, %s56
      %p68 = scmp.eq.s32.totalorder %s25, 7
      %p69 = por %p67, %p68
      %p71 = scmp.ne.s32.totalorder %s56, %s70
      %p72 = scmp.eq.s32.totalorder %s25, 0
      %p73 = por %p71, %p72
      %s75 = sadd.s32 %s74, 1
      %p78 = scmp.eq.s32.totalorder %s19, 7
      %p79 = scmp.ne.s32.totalorder %s74, %s76
      %p80 = scmp.eq.s32.totalorder %s19, 0
      %p81 = por %p79, %p80
      %p82 = scmp.ne.s32.totalorder %s74, %s76
      %p83 = scmp.eq.s32.totalorder %s24, 7
      %p84 = por %p82, %p83
      %p85 = scmp.ne.s32.totalorder %s76, %s77
      %p86 = scmp.eq.s32.totalorder %s24, 0
      %p87 = por %p85, %p86
      %p88 = scmp.ne.s32.totalorder %s76, %s77
      %p89 = scmp.eq.s32.totalorder %s25, 7
      %p90 = por %p88, %p89
      %p92 = scmp.ne.s32.totalorder %s77, %s91
      %p93 = scmp.eq.s32.totalorder %s25, 0
      %p94 = por %p92, %p93
      %s96 = sadd.s32 %s95, 1
      %p99 = scmp.eq.s32.totalorder %s19, 7
      %p100 = scmp.ne.s32.totalorder %s95, %s97
      %p101 = scmp.eq.s32.totalorder %s19, 0
      %p102 = por %p100, %p101
      %p103 = scmp.ne.s32.totalorder %s95, %s97
      %p104 = scmp.eq.s32.totalorder %s24, 7
      %p105 = por %p103, %p104
      %p106 = scmp.ne.s32.totalorder %s97, %s98
      %p107 = scmp.eq.s32.totalorder %s24, 0
      %p108 = por %p106, %p107
      %p109 = scmp.ne.s32.totalorder %s97, %s98
      %p110 = scmp.eq.s32.totalorder %s25, 7
      %p111 = por %p109, %p110
      %p113 = scmp.ne.s32.totalorder %s98, %s112
      %p114 = scmp.eq.s32.totalorder %s25, 0
      %p115 = por %p113, %p114
      %s117 = sadd.s32 %s116, 1
      %p120 = scmp.eq.s32.totalorder %s19, 7
      %p121 = scmp.ne.s32.totalorder %s116, %s118
      %p122 = scmp.eq.s32.totalorder %s19, 0
      %p123 = por %p121, %p122
      %p124 = scmp.ne.s32.totalorder %s116, %s118
      %p125 = scmp.eq.s32.totalorder %s24, 7
      %p126 = por %p124, %p125
      %p127 = scmp.ne.s32.totalorder %s118, %s119
      %p128 = scmp.eq.s32.totalorder %s24, 0
      %p129 = por %p127, %p128
      %p130 = scmp.ne.s32.totalorder %s118, %s119
      %p131 = scmp.eq.s32.totalorder %s25, 7
      %p132 = por %p130, %p131
      %p134 = scmp.ne.s32.totalorder %s119, %s133
      %p135 = scmp.eq.s32.totalorder %s25, 0
      %p136 = por %p134, %p135
      %s138 = sadd.s32 %s137, 1
      %p141 = scmp.eq.s32.totalorder %s19, 7
      %p142 = scmp.ne.s32.totalorder %s137, %s139
      %p143 = scmp.eq.s32.totalorder %s19, 0
      %p144 = por %p142, %p143
      %p145 = scmp.ne.s32.totalorder %s137, %s139
      %p146 = scmp.eq.s32.totalorder %s24, 7
      %p147 = por %p145, %p146
      %p148 = scmp.ne.s32.totalorder %s139, %s140
      %p149 = scmp.eq.s32.totalorder %s24, 0
      %p150 = por %p148, %p149
      %p151 = scmp.ne.s32.totalorder %s139, %s140
      %p152 = scmp.eq.s32.totalorder %s25, 7
      %p153 = por %p151, %p152
      %p155 = scmp.ne.s32.totalorder %s140, %s154
      %p156 = scmp.eq.s32.totalorder %s25, 0
      %p157 = por %p155, %p156
      %s159 = sadd.s32 %s158, 1
      %p162 = scmp.eq.s32.totalorder %s19, 7
      %p163 = scmp.ne.s32.totalorder %s158, %s160
      %p164 = scmp.eq.s32.totalorder %s19, 0
      %p165 = por %p163, %p164
      %p166 = scmp.ne.s32.totalorder %s158, %s160
      %p167 = scmp.eq.s32.totalorder %s24, 7
      %p168 = por %p166, %p167
      %p169 = scmp.ne.s32.totalorder %s160, %s161
      %p170 = scmp.eq.s32.totalorder %s24, 0
      %p171 = por %p169, %p170
      %p172 = scmp.ne.s32.totalorder %s160, %s161
      %p173 = scmp.eq.s32.totalorder %s25, 7
      %p174 = por %p172, %p173
      %p176 = scmp.ne.s32.totalorder %s161, %s175
      %p177 = scmp.eq.s32.totalorder %s25, 0
      %p178 = por %p176, %p177
      %s180 = sadd.s32 %s179, 1
      %p183 = scmp.eq.s32.totalorder %s19, 7
      %p184 = scmp.ne.s32.totalorder %s179, %s181
      %p185 = scmp.eq.s32.totalorder %s19, 0
      %p186 = por %p184, %p185
      %p187 = scmp.ne.s32.totalorder %s179, %s181
      %p188 = scmp.eq.s32.totalorder %s24, 7
      %p189 = por %p187, %p188
      %p190 = scmp.ne.s32.totalorder %s181, %s182
      %p191 = scmp.eq.s32.totalorder %s24, 0
      %p192 = por %p190, %p191
      %p193 = scmp.ne.s32.totalorder %s181, %s182
      %p194 = scmp.eq.s32.totalorder %s25, 7
      %p195 = por %p193, %p194
      %p197 = scmp.ne.s32.totalorder %s182, %s196
      %p198 = scmp.eq.s32.totalorder %s25, 0
      %p199 = por %p197, %p198
      %s201 = sadd.s32 %s200, 1
      %p204 = scmp.eq.s32.totalorder %s19, 7
      %p205 = scmp.ne.s32.totalorder %s200, %s202
      %p206 = scmp.eq.s32.totalorder %s19, 0
      %p207 = por %p205, %p206
      %p208 = scmp.ne.s32.totalorder %s200, %s202
      %p209 = scmp.eq.s32.totalorder %s24, 7
      %p210 = por %p208, %p209
      %p211 = scmp.ne.s32.totalorder %s202, %s203
      %p212 = scmp.eq.s32.totalorder %s24, 0
      %p213 = por %p211, %p212
      %p214 = scmp.ne.s32.totalorder %s202, %s203
      %p215 = scmp.eq.s32.totalorder %s25, 7
      %p216 = por %p214, %p215
      %p218 = scmp.ne.s32.totalorder %s203, %s217
      %p219 = scmp.eq.s32.totalorder %s25, 0
      %p220 = por %p218, %p219
      %p221 = scmp.le.s32.totalorder 1, %s19
      %p222 = scmp.lt.s32.totalorder %s19, 9
      %p223 = pnand %p221, %p222
      %p224 = pneg %p223
      // Predicated region
      $region9: #{tpu_custom_call.1} parent=5 // pred_check
        _
      $region10: #{tpu_custom_call.1} parent=5 // pred_check_branch
        %226 = sbr.rel (%p223) target = $region12
      $region11: #{tpu_custom_call.1} parent=5 // pred_region
        %s227 = ssub.s32 %s19, 1
        // Predicated region
        $region13: #{tpu_custom_call.1} parent=11 // pred_check
          %p228 = pneg %p66
        $region14: #{tpu_custom_call.1} parent=11 // pred_check_branch
          %230 = sbr.rel (%p228) target = $region16
        $region15: #{tpu_custom_call.1} parent=11 // pred_region
          _
        $region16: #{tpu_custom_call.1} parent=11 // pred_fallthru
          _
        // Predicated region
        $region17: #{tpu_custom_call.1} parent=11 // pred_check
          %p231 = pneg %p87
        $region18: #{tpu_custom_call.1} parent=11 // pred_check_branch
          %233 = sbr.rel (%p231) target = $region20
        $region19: #{tpu_custom_call.1} parent=11 // pred_region
          _
        $region20: #{tpu_custom_call.1} parent=11 // pred_fallthru
          _
        // Predicated region
        $region21: #{tpu_custom_call.1} parent=11 // pred_check
          %p234 = pneg %p108
        $region22: #{tpu_custom_call.1} parent=11 // pred_check_branch
          %236 = sbr.rel (%p234) target = $region24
        $region23: #{tpu_custom_call.1} parent=11 // pred_region
          _
        $region24: #{tpu_custom_call.1} parent=11 // pred_fallthru
          _
        // Predicated region
        $region25: #{tpu_custom_call.1} parent=11 // pred_check
          %p237 = pneg %p129
        $region26: #{tpu_custom_call.1} parent=11 // pred_check_branch
          %239 = sbr.rel (%p237) target = $region28
        $region27: #{tpu_custom_call.1} parent=11 // pred_region
          %s241 = ssub.s32 512, 512
          %242 = vsyncadd [#allocation4], %s241
          %s243 = sshll.u32 [#allocation3], 4
          %s244 = int_to_ptr.vmem [resolvable:$true] %s243
          %249 = dma.hbm_to_vmem [thread:$0]  %s4, 512, %s244, [#allocation4], 128, 128, 8
        $region28: #{tpu_custom_call.1} parent=11 // pred_fallthru
          _
        // Predicated region
        $region29: #{tpu_custom_call.1} parent=11 // pred_check
          %p250 = pneg %p150
        $region30: #{tpu_custom_call.1} parent=11 // pred_check_branch
          %252 = sbr.rel (%p250) target = $region32
        $region31: #{tpu_custom_call.1} parent=11 // pred_region
          %s254 = ssub.s32 512, 512
          %255 = vsyncadd [#allocation7], %s254
          %s256 = sshll.u32 [#allocation6], 4
          %s257 = int_to_ptr.vmem [resolvable:$true] %s256
          %262 = dma.hbm_to_vmem [thread:$0]  %s5, 512, %s257, [#allocation7], 128, 128, 8
        $region32: #{tpu_custom_call.1} parent=11 // pred_fallthru
          _
        // Predicated region
        $region33: #{tpu_custom_call.1} parent=11 // pred_check
          %p263 = pneg %p171
        $region34: #{tpu_custom_call.1} parent=11 // pred_check_branch
          %265 = sbr.rel (%p263) target = $region36
        $region35: #{tpu_custom_call.1} parent=11 // pred_region
          _
        $region36: #{tpu_custom_call.1} parent=11 // pred_fallthru
          _
      $region12: #{tpu_custom_call.1} parent=5 // pred_fallthru
        _
      %p266 = scmp.lt.s32.totalorder %s19, 8
      // Predicated region
      $region37: #{tpu_custom_call.1} parent=5 // pred_check
        %p267 = pneg %p266
      $region38: #{tpu_custom_call.1} parent=5 // pred_check_branch
        %269 = sbr.rel (%p267) target = $region40
      $region39: #{tpu_custom_call.1} parent=5 // pred_region
        // Predicated region
        $region41: #{tpu_custom_call.1} parent=39 // pred_check
          %p270 = pneg %p39
        $region42: #{tpu_custom_call.1} parent=39 // pred_check_branch
          %272 = sbr.rel (%p270) target = $region44
        $region43: #{tpu_custom_call.1} parent=39 // pred_region
          %p273 = scmp.lt.s32.totalorder %s19, 7
          %s274 = scalar_select %p273, %s19, 7
          %s275 = smul.addr %s274, 8
          %s276 = scalar_lea.vmem %s0, %s275
        $region44: #{tpu_custom_call.1} parent=39 // pred_fallthru
          _
      $region40: #{tpu_custom_call.1} parent=5 // pred_fallthru
        _
      %p277 = scmp.le.s32.totalorder 1, %s19
      %p278 = scmp.lt.s32.totalorder %s19, 9
      %p279 = pnand %p277, %p278
      %p280 = pneg %p279
      // Predicated region
      $region45: #{tpu_custom_call.1} parent=5 // pred_check
        _
      $region46: #{tpu_custom_call.1} parent=5 // pred_check_branch
        %282 = sbr.rel (%p279) target = $region48
      $region47: #{tpu_custom_call.1} parent=5 // pred_region
        %s283 = ssub.s32 %s19, 1
        // Predicated region
        $region49: #{tpu_custom_call.1} parent=47 // pred_check
          %p284 = pneg %p129
        $region50: #{tpu_custom_call.1} parent=47 // pred_check_branch
          %286 = sbr.rel (%p284) target = $region52
        $region51: #{tpu_custom_call.1} parent=47 // pred_region
          %287 = dma.done [#allocation4], 512
        $region52: #{tpu_custom_call.1} parent=47 // pred_fallthru
          _
        // Predicated region
        $region53: #{tpu_custom_call.1} parent=47 // pred_check
          %p288 = pneg %p150
        $region54: #{tpu_custom_call.1} parent=47 // pred_check_branch
          %290 = sbr.rel (%p288) target = $region56
        $region55: #{tpu_custom_call.1} parent=47 // pred_region
          %291 = dma.done [#allocation7], 512
        $region56: #{tpu_custom_call.1} parent=47 // pred_fallthru
          _
        %p292 = scmp.lt.s32.totalorder %s24, 7
        %s293 = scalar_select %p292, %s24, 7
        %s294 = smul.addr %s293, 8
        %s295 = scalar_lea.vmem %s0, %s294
        %p296 = pneg %p45
        %p297 = pneg %p42
        %p298 = pneg %p66
        %p299 = pneg %p63
        %p300 = pneg %p87
        %p301 = pneg %p84
        %p302 = pneg %p108
        %p303 = pneg %p105
        %p304 = pneg %p129
        %p305 = pneg %p126
        %p306 = pneg %p150
        %p307 = pneg %p147
        %p308 = pneg %p171
        %p309 = pneg %p168
        %p310 = pneg %p192
        %p311 = pneg %p189
        %p312 = pneg %p213
        %p313 = pneg %p210
        %p314 = scmp.lt.s32.totalorder %s24, 7
        %s315 = scalar_select %p314, %s24, 7
        %s316 = smul.addr %s315, 8
        %s317 = scalar_lea.vmem %s0, %s316
        %p318 = scmp.eq.s32.totalorder %s24, 0
        // Predicated region
        $region57: #{tpu_custom_call.1} parent=47 // pred_check
          %p319 = pneg %p318
        $region58: #{tpu_custom_call.1} parent=47 // pred_check_branch
          %321 = sbr.rel (%p319) target = $region60
        $region59: #{tpu_custom_call.1} parent=47 // pred_region
          %vm322 = vcmask 261120
          %323 = vst.msk [vmem:[#allocation2] sm:$0xff] %vm322, 0.0
          %324 = vst.msk [vmem:[#allocation2 + $0x8] sm:$0xff] %vm322, 0.0
        $region60: #{tpu_custom_call.1} parent=47 // pred_fallthru
          _
        %v325 = vld [vmem:[%s317] sm:$0xff]
        %v326 = vld [vmem:[#allocation2] sm:$0xff]
        %v327 = vld [vmem:[%s1] sm:$0xff]
        %v328 = vld [vmem:[%s1 + $0x8] sm:$0xff]
        %v329 = vld [vmem:[%s1 + $0x10] sm:$0xff]
        %v330 = vld [vmem:[%s1 + $0x18] sm:$0xff]
        %v331 = vld [vmem:[%s1 + $0x20] sm:$0xff]
        %v332 = vld [vmem:[%s1 + $0x28] sm:$0xff]
        %v333 = vld [vmem:[%s1 + $0x30] sm:$0xff]
        %v334 = vld [vmem:[%s1 + $0x38] sm:$0x1]
        %v335 = vld [vmem:[%s2] sm:$0xff]
        %v336 = vld [vmem:[%s2 + $0x8] sm:$0xff]
        %v337 = vld [vmem:[%s2 + $0x10] sm:$0xff]
        %v338 = vld [vmem:[%s2 + $0x18] sm:$0xff]
        %vm339 = vcmask 261120
        %v341 = vsel %vm339, %v326, 0
        %343 = vmatprep.subr.mxu0 0.0
        %344 = vmatpush1.msra.mxu0 %v335
        %345 = vmatprep.subr.mxu0 0.0
        %346 = vmatpush1.msra.mxu0 %v336
        %347 = vmatprep.subr.mxu0 0.0
        %348 = vmatpush1.msra.mxu0 %v337
        %349 = vmatprep.subr.mxu0 0.0
        %350 = vmatpush1.msra.mxu0 %v338
        %351 = vmatprep.subr.mxu0 0.0
        %352 = vmatpush1.msra.mxu0 0.0
        %353 = vmatprep.subr.mxu0 0.0
        %354 = vmatpush1.msra.mxu0 0.0
        %355 = vmatprep.subr.mxu0 0.0
        %356 = vmatpush1.msra.mxu0 0.0
        %357 = vmatprep.subr.mxu0 0.0
        %358 = vmatpush1.msra.mxu0 0.0
        %359 = vmatprep.subr.mxu0 0.0
        %360 = vmatpush1.msra.mxu0 0.0
        %361 = vmatprep.subr.mxu0 0.0
        %362 = vmatpush1.msra.mxu0 0.0
        %363 = vmatprep.subr.mxu0 0.0
        %364 = vmatpush1.msra.mxu0 0.0
        %365 = vmatprep.subr.mxu0 0.0
        %366 = vmatpush1.msra.mxu0 0.0
        %367 = vmatprep.subr.mxu0 0.0
        %368 = vmatpush1.msra.mxu0 0.0
        %369 = vmatprep.subr.mxu0 0.0
        %370 = vmatpush1.msra.mxu0 0.0
        %371 = vmatprep.subr.mxu0 0.0
        %372 = vmatpush1.msra.mxu0 0.0
        %373 = vmatprep.subr.mxu0 0.0
        %374 = vmatpush1.msra.mxu0 0.0
        %375 = vmatprep.subr.mxu0 0.0
        %376 = vmatpush1.msra.mxu0 0.0
        %377 = vmatprep.subr.mxu0 0.0
        %378 = vmatpush1.msra.mxu0 0.0
        %379 = vmatprep.subr.mxu0 0.0
        %380 = vmatpush1.msra.mxu0 0.0
        %381 = vmatprep.subr.mxu0 0.0
        %382 = vmatpush1.msra.mxu0 0.0
        %383 = vmatprep.subr.mxu0 0.0
        %384 = vmatpush1.msra.mxu0 0.0
        %385 = vmatprep.subr.mxu0 0.0
        %386 = vmatpush1.msra.mxu0 0.0
        %387 = vmatprep.subr.mxu0 0.0
        %388 = vmatpush1.msra.mxu0 0.0
        %389 = vmatprep.subr.mxu0 0.0
        %390 = vmatpush1.msra.mxu0 0.0
        %391 = vmatprep.subr.mxu0 0.0
        %392 = vmatpush1.msra.mxu0 0.0
        %393 = vmatprep.subr.mxu0 0.0
        %394 = vmatpush1.msra.mxu0 0.0
        %395 = vmatprep.subr.mxu0 0.0
        %396 = vmatpush1.msra.mxu0 0.0
        %397 = vmatprep.subr.mxu0 0.0
        %398 = vmatpush1.msra.mxu0 0.0
        %399 = vmatprep.subr.mxu0 0.0
        %400 = vmatpush1.msra.mxu0 0.0
        %401 = vmatprep.subr.mxu0 0.0
        %402 = vmatpush1.msra.mxu0 0.0
        %403 = vmatprep.subr.mxu0 0.0
        %404 = vmatpush1.msra.mxu0 0.0
        %405 = vmatprep.subr.mxu0 0.0
        %406 = vmatpush1.msra.mxu0 0.0
        %407 = vmatprep.mubr.f32.mxu0 0.0
        %408 = vmatmul.mubr.f32.gmra.mrb[0].mxu0 %v341
        %v409 = vpop.f32.mrb[0].mxu0
        %v410 = vadd.f32 0.0, %v409
        %v411 = vpop.f32.mrb[0].mxu0
        %412 = vdwg.mxu0
        %vm413 = vcmask 465920
        %v415 = vsel %vm413, %v325, 0
        %vm417 = vcmask 1040384
        %v419 = vsel %vm417, %v334, 0
        %421 = vmatprep.subr.mxu0 0.0
        %422 = vmatpush1.msra.mxu0 %v327
        %423 = vmatprep.subr.mxu0 0.0
        %424 = vmatpush1.msra.mxu0 %v328
        %425 = vmatprep.subr.mxu0 0.0
        %426 = vmatpush1.msra.mxu0 %v329
        %427 = vmatprep.subr.mxu0 0.0
        %428 = vmatpush1.msra.mxu0 %v330
        %429 = vmatprep.subr.mxu0 0.0
        %430 = vmatpush1.msra.mxu0 %v331
        %431 = vmatprep.subr.mxu0 0.0
        %432 = vmatpush1.msra.mxu0 %v332
        %433 = vmatprep.subr.mxu0 0.0
        %434 = vmatpush1.msra.mxu0 %v333
        %435 = vmatprep.subr.mxu0 0.0
        %436 = vmatpush1.msra.mxu0 %v419
        %437 = vmatprep.subr.mxu0 0.0
        %438 = vmatpush1.msra.mxu0 0.0
        %439 = vmatprep.subr.mxu0 0.0
        %440 = vmatpush1.msra.mxu0 0.0
        %441 = vmatprep.subr.mxu0 0.0
        %442 = vmatpush1.msra.mxu0 0.0
        %443 = vmatprep.subr.mxu0 0.0
        %444 = vmatpush1.msra.mxu0 0.0
        %445 = vmatprep.subr.mxu0 0.0
        %446 = vmatpush1.msra.mxu0 0.0
        %447 = vmatprep.subr.mxu0 0.0
        %448 = vmatpush1.msra.mxu0 0.0
        %449 = vmatprep.subr.mxu0 0.0
        %450 = vmatpush1.msra.mxu0 0.0
        %451 = vmatprep.subr.mxu0 0.0
        %452 = vmatpush1.msra.mxu0 0.0
        %453 = vmatprep.subr.mxu0 0.0
        %454 = vmatpush1.msra.mxu0 0.0
        %455 = vmatprep.subr.mxu0 0.0
        %456 = vmatpush1.msra.mxu0 0.0
        %457 = vmatprep.subr.mxu0 0.0
        %458 = vmatpush1.msra.mxu0 0.0
        %459 = vmatprep.subr.mxu0 0.0
        %460 = vmatpush1.msra.mxu0 0.0
        %461 = vmatprep.subr.mxu0 0.0
        %462 = vmatpush1.msra.mxu0 0.0
        %463 = vmatprep.subr.mxu0 0.0
        %464 = vmatpush1.msra.mxu0 0.0
        %465 = vmatprep.subr.mxu0 0.0
        %466 = vmatpush1.msra.mxu0 0.0
        %467 = vmatprep.subr.mxu0 0.0
        %468 = vmatpush1.msra.mxu0 0.0
        %469 = vmatprep.subr.mxu0 0.0
        %470 = vmatpush1.msra.mxu0 0.0
        %471 = vmatprep.subr.mxu0 0.0
        %472 = vmatpush1.msra.mxu0 0.0
        %473 = vmatprep.subr.mxu0 0.0
        %474 = vmatpush1.msra.mxu0 0.0
        %475 = vmatprep.subr.mxu0 0.0
        %476 = vmatpush1.msra.mxu0 0.0
        %477 = vmatprep.subr.mxu0 0.0
        %478 = vmatpush1.msra.mxu0 0.0
        %479 = vmatprep.subr.mxu0 0.0
        %480 = vmatpush1.msra.mxu0 0.0
        %481 = vmatprep.subr.mxu0 0.0
        %482 = vmatpush1.msra.mxu0 0.0
        %483 = vmatprep.subr.mxu0 0.0
        %484 = vmatpush1.msra.mxu0 0.0
        %485 = vmatprep.mubr.f32.mxu0 0.0
        %486 = vmatmul.mubr.f32.gmra.mrb[0].mxu0 %v415
        %v487 = vpop.f32.mrb[0].mxu0
        %v488 = vadd.f32 %v410, %v487
        %v489 = vpop.f32.mrb[0].mxu0
        %490 = vdwg.mxu0
        %v491 = vld [vmem:[%s3] sm:$0x1]
        %v493 = vlaneseq
        %v494 = vshrl.u32 %v493, 7
        %v495 = vsub.s32 0, %v494
        %v496 = vrot.slane %v491, %v495
        %v498 = vadd.f32 %v488, %v496
        %v499 = vtanh.pop %v498
        %500 = vst.msk [vmem:[#allocation2] sm:$0xff] %vm339, %v499
        %s501 = scalar_lea.vmem [#allocation2], 8
        %v502 = vld [vmem:[%s501] sm:$0xff]
        %v503 = vld [vmem:[#allocation3] sm:$0xff]
        %v504 = vld [vmem:[#allocation3 + $0x8] sm:$0xff]
        %v505 = vld [vmem:[#allocation3 + $0x10] sm:$0xff]
        %v506 = vld [vmem:[#allocation3 + $0x18] sm:$0xff]
        %v507 = vld [vmem:[#allocation6] sm:$0xff]
        %v508 = vld [vmem:[#allocation6 + $0x8] sm:$0xff]
        %v509 = vld [vmem:[#allocation6 + $0x10] sm:$0xff]
        %v510 = vld [vmem:[#allocation6 + $0x18] sm:$0xff]
        %v512 = vsel %vm339, %v502, 0
        %514 = vmatprep.subr.mxu0 0.0
        %515 = vmatpush1.msra.mxu0 %v507
        %516 = vmatprep.subr.mxu0 0.0
        %517 = vmatpush1.msra.mxu0 %v508
        %518 = vmatprep.subr.mxu0 0.0
        %519 = vmatpush1.msra.mxu0 %v509
        %520 = vmatprep.subr.mxu0 0.0
        %521 = vmatpush1.msra.mxu0 %v510
        %522 = vmatprep.subr.mxu0 0.0
        %523 = vmatpush1.msra.mxu0 0.0
        %524 = vmatprep.subr.mxu0 0.0
        %525 = vmatpush1.msra.mxu0 0.0
        %526 = vmatprep.subr.mxu0 0.0
        %527 = vmatpush1.msra.mxu0 0.0
        %528 = vmatprep.subr.mxu0 0.0
        %529 = vmatpush1.msra.mxu0 0.0
        %530 = vmatprep.subr.mxu0 0.0
        %531 = vmatpush1.msra.mxu0 0.0
        %532 = vmatprep.subr.mxu0 0.0
        %533 = vmatpush1.msra.mxu0 0.0
        %534 = vmatprep.subr.mxu0 0.0
        %535 = vmatpush1.msra.mxu0 0.0
        %536 = vmatprep.subr.mxu0 0.0
        %537 = vmatpush1.msra.mxu0 0.0
        %538 = vmatprep.subr.mxu0 0.0
        %539 = vmatpush1.msra.mxu0 0.0
        %540 = vmatprep.subr.mxu0 0.0
        %541 = vmatpush1.msra.mxu0 0.0
        %542 = vmatprep.subr.mxu0 0.0
        %543 = vmatpush1.msra.mxu0 0.0
        %544 = vmatprep.subr.mxu0 0.0
        %545 = vmatpush1.msra.mxu0 0.0
        %546 = vmatprep.subr.mxu0 0.0
        %547 = vmatpush1.msra.mxu0 0.0
        %548 = vmatprep.subr.mxu0 0.0
        %549 = vmatpush1.msra.mxu0 0.0
        %550 = vmatprep.subr.mxu0 0.0
        %551 = vmatpush1.msra.mxu0 0.0
        %552 = vmatprep.subr.mxu0 0.0
        %553 = vmatpush1.msra.mxu0 0.0
        %554 = vmatprep.subr.mxu0 0.0
        %555 = vmatpush1.msra.mxu0 0.0
        %556 = vmatprep.subr.mxu0 0.0
        %557 = vmatpush1.msra.mxu0 0.0
        %558 = vmatprep.subr.mxu0 0.0
        %559 = vmatpush1.msra.mxu0 0.0
        %560 = vmatprep.subr.mxu0 0.0
        %561 = vmatpush1.msra.mxu0 0.0
        %562 = vmatprep.subr.mxu0 0.0
        %563 = vmatpush1.msra.mxu0 0.0
        %564 = vmatprep.subr.mxu0 0.0
        %565 = vmatpush1.msra.mxu0 0.0
        %566 = vmatprep.subr.mxu0 0.0
        %567 = vmatpush1.msra.mxu0 0.0
        %568 = vmatprep.subr.mxu0 0.0
        %569 = vmatpush1.msra.mxu0 0.0
        %570 = vmatprep.subr.mxu0 0.0
        %571 = vmatpush1.msra.mxu0 0.0
        %572 = vmatprep.subr.mxu0 0.0
        %573 = vmatpush1.msra.mxu0 0.0
        %574 = vmatprep.subr.mxu0 0.0
        %575 = vmatpush1.msra.mxu0 0.0
        %576 = vmatprep.subr.mxu0 0.0
        %577 = vmatpush1.msra.mxu0 0.0
        %578 = vmatprep.mubr.f32.mxu0 0.0
        %579 = vmatmul.mubr.f32.gmra.mrb[0].mxu0 %v512
        %v580 = vpop.f32.mrb[0].mxu0
        %v581 = vadd.f32 0.0, %v580
        %v582 = vpop.f32.mrb[0].mxu0
        %583 = vdwg.mxu0
        %v585 = vsel %vm339, %v499, 0
        %587 = vmatprep.subr.mxu0 0.0
        %588 = vmatpush1.msra.mxu0 %v503
        %589 = vmatprep.subr.mxu0 0.0
        %590 = vmatpush1.msra.mxu0 %v504
        %591 = vmatprep.subr.mxu0 0.0
        %592 = vmatpush1.msra.mxu0 %v505
        %593 = vmatprep.subr.mxu0 0.0
        %594 = vmatpush1.msra.mxu0 %v506
        %595 = vmatprep.subr.mxu0 0.0
        %596 = vmatpush1.msra.mxu0 0.0
        %597 = vmatprep.subr.mxu0 0.0
        %598 = vmatpush1.msra.mxu0 0.0
        %599 = vmatprep.subr.mxu0 0.0
        %600 = vmatpush1.msra.mxu0 0.0
        %601 = vmatprep.subr.mxu0 0.0
        %602 = vmatpush1.msra.mxu0 0.0
        %603 = vmatprep.subr.mxu0 0.0
        %604 = vmatpush1.msra.mxu0 0.0
        %605 = vmatprep.subr.mxu0 0.0
        %606 = vmatpush1.msra.mxu0 0.0
        %607 = vmatprep.subr.mxu0 0.0
        %608 = vmatpush1.msra.mxu0 0.0
        %609 = vmatprep.subr.mxu0 0.0
        %610 = vmatpush1.msra.mxu0 0.0
        %611 = vmatprep.subr.mxu0 0.0
        %612 = vmatpush1.msra.mxu0 0.0
        %613 = vmatprep.subr.mxu0 0.0
        %614 = vmatpush1.msra.mxu0 0.0
        %615 = vmatprep.subr.mxu0 0.0
        %616 = vmatpush1.msra.mxu0 0.0
        %617 = vmatprep.subr.mxu0 0.0
        %618 = vmatpush1.msra.mxu0 0.0
        %619 = vmatprep.subr.mxu0 0.0
        %620 = vmatpush1.msra.mxu0 0.0
        %621 = vmatprep.subr.mxu0 0.0
        %622 = vmatpush1.msra.mxu0 0.0
        %623 = vmatprep.subr.mxu0 0.0
        %624 = vmatpush1.msra.mxu0 0.0
        %625 = vmatprep.subr.mxu0 0.0
        %626 = vmatpush1.msra.mxu0 0.0
        %627 = vmatprep.subr.mxu0 0.0
        %628 = vmatpush1.msra.mxu0 0.0
        %629 = vmatprep.subr.mxu0 0.0
        %630 = vmatpush1.msra.mxu0 0.0
        %631 = vmatprep.subr.mxu0 0.0
        %632 = vmatpush1.msra.mxu0 0.0
        %633 = vmatprep.subr.mxu0 0.0
        %634 = vmatpush1.msra.mxu0 0.0
        %635 = vmatprep.subr.mxu0 0.0
        %636 = vmatpush1.msra.mxu0 0.0
        %637 = vmatprep.subr.mxu0 0.0
        %638 = vmatpush1.msra.mxu0 0.0
        %639 = vmatprep.subr.mxu0 0.0
        %640 = vmatpush1.msra.mxu0 0.0
        %641 = vmatprep.subr.mxu0 0.0
        %642 = vmatpush1.msra.mxu0 0.0
        %643 = vmatprep.subr.mxu0 0.0
        %644 = vmatpush1.msra.mxu0 0.0
        %645 = vmatprep.subr.mxu0 0.0
        %646 = vmatpush1.msra.mxu0 0.0
        %647 = vmatprep.subr.mxu0 0.0
        %648 = vmatpush1.msra.mxu0 0.0
        %649 = vmatprep.subr.mxu0 0.0
        %650 = vmatpush1.msra.mxu0 0.0
        %651 = vmatprep.mubr.f32.mxu0 0.0
        %652 = vmatmul.mubr.f32.gmra.mrb[0].mxu0 %v585
        %v653 = vpop.f32.mrb[0].mxu0
        %v654 = vadd.f32 %v581, %v653
        %v655 = vpop.f32.mrb[0].mxu0
        %656 = vdwg.mxu0
        %v657 = vld [vmem:[%s6] sm:$0x1]
        %v659 = vlaneseq
        %v660 = vshrl.u32 %v659, 7
        %v661 = vsub.s32 0, %v660
        %v662 = vrot.slane %v657, %v661
        %v664 = vadd.f32 %v654, %v662
        %v665 = vtanh.pop %v664
        %666 = vst.msk [vmem:[%s501] sm:$0xff] %vm339, %v665
        %p667 = scmp.eq.s32.totalorder %s24, 7
        // Predicated region
        $region61: #{tpu_custom_call.1} parent=47 // pred_check
          %p668 = pneg %p667
        $region62: #{tpu_custom_call.1} parent=47 // pred_check_branch
          %670 = sbr.rel (%p668) target = $region64
        $region63: #{tpu_custom_call.1} parent=47 // pred_region
          %v671 = vld [vmem:[#allocation2] sm:$0xff]
          %v672 = vld [vmem:[#allocation2 + $0x8] sm:$0xff]
          %673 = vst.msk [vmem:[#allocation9] sm:$0xff] %vm339, %v671
          %674 = vst.msk [vmem:[#allocation9 + $0x8] sm:$0xff] %vm339, %v672
          %v675 = vld [vmem:[%s501] sm:$0xff]
          %v676 = vsel %vm339, %v675, -inf
          %677 = vmax.xlane.f32.xlu0 %v676
          %v678 = vpop.xlane.xlu0 %677
          %v679 = vsub.f32 %v675, %v678
          %v680 = vmul.f32 %v679, 1.442695
          %v681 = vpow.pop %v680
          %v682 = vsel %vm339, %v681, 0.0
          %683 = vadd.xlane.f32.xlu0 %v682
          %v684 = vpop.xlane.xlu0 %683
          %v685 = vlog2.pop %v684
          %v686 = vmul.f32 %v685, 0.6931472
          %v687 = vsub.f32 %v679, %v686
          %688 = vst.msk [vmem:[#allocation8] sm:$0xff] %vm339, %v687
        $region64: #{tpu_custom_call.1} parent=47 // pred_fallthru
          _
        // Predicated region
        $region65: #{tpu_custom_call.1} parent=47 // pred_check
          %p689 = pneg %p189
        $region66: #{tpu_custom_call.1} parent=47 // pred_check_branch
          %691 = sbr.rel (%p689) target = $region68
        $region67: #{tpu_custom_call.1} parent=47 // pred_region
          %s693 = ssub.s32 128, 128
          %694 = vsyncadd [#allocation5], %s693
          %s696 = sshll.u32 [#allocation8], 4
          %s697 = int_to_ptr.vmem [resolvable:$true] %s696
          %699 = dma.vmem_to_hbm [thread:$0]  %s697, 128, %s7, [#allocation5]
        $region68: #{tpu_custom_call.1} parent=47 // pred_fallthru
          _
        // Predicated region
        $region69: #{tpu_custom_call.1} parent=47 // pred_check
          %p700 = pneg %p210
        $region70: #{tpu_custom_call.1} parent=47 // pred_check_branch
          %702 = sbr.rel (%p700) target = $region72
        $region71: #{tpu_custom_call.1} parent=47 // pred_region
          %s704 = ssub.s32 256, 256
          %705 = vsyncadd [#allocation10], %s704
          %s706 = sshll.u32 [#allocation9], 4
          %s707 = int_to_ptr.vmem [resolvable:$true] %s706
          %712 = dma.vmem_to_hbm [thread:$0]  %s707, 256, %s8, [#allocation10], 128, 128, 8
        $region72: #{tpu_custom_call.1} parent=47 // pred_fallthru
          _
        // Predicated region
        $region73: #{tpu_custom_call.1} parent=47 // pred_check
          %p713 = pneg %p189
        $region74: #{tpu_custom_call.1} parent=47 // pred_check_branch
          %715 = sbr.rel (%p713) target = $region76
        $region75: #{tpu_custom_call.1} parent=47 // pred_region
          %716 = dma.done [#allocation5], 128
        $region76: #{tpu_custom_call.1} parent=47 // pred_fallthru
          _
        // Predicated region
        $region77: #{tpu_custom_call.1} parent=47 // pred_check
          %p717 = pneg %p210
        $region78: #{tpu_custom_call.1} parent=47 // pred_check_branch
          %719 = sbr.rel (%p717) target = $region80
        $region79: #{tpu_custom_call.1} parent=47 // pred_region
          %720 = dma.done [#allocation10], 256
        $region80: #{tpu_custom_call.1} parent=47 // pred_fallthru
          _
      $region48: #{tpu_custom_call.1} parent=5 // pred_fallthru
        _
      %p721 = scmp.le.s32.totalorder 2, %s19
      // Predicated region
      $region81: #{tpu_custom_call.1} parent=5 // pred_check
        %p722 = pneg %p721
      $region82: #{tpu_custom_call.1} parent=5 // pred_check_branch
        %724 = sbr.rel (%p722) target = $region84
      $region83: #{tpu_custom_call.1} parent=5 // pred_region
        %s725 = ssub.s32 %s19, 2
      $region84: #{tpu_custom_call.1} parent=5 // pred_fallthru
        _
    $region6: #{tpu_custom_call.1} parent=1 // loop_footer
      %s23 = sadd.s32 1, %s19
    $region7: #{tpu_custom_call.1} parent=1 // loop_footer_branch
      %18 = sbr.rel target = $region3
    $region8: #{tpu_custom_call.1} parent=1 // loop_exit
      _
    %726 = vsyncpa [#allocation4], 1
    %s727 = scalar_lea.sflag [#allocation4], 1
    %728 = vsyncpa %s727, 1
    %729 = vsyncpa [#allocation7], 1
    %730 = vsyncpa [#allocation5], 1
    %s731 = scalar_lea.sflag [#allocation5], 1
    %732 = vsyncpa %s731, 1
    %733 = vsyncpa [#allocation10], 1

</llo_original>
